<compile_context>
chip_gen: v6e
topology: v6e:2x2x1
jax: 0.10.0
libtpu: 0.0.40
codegen_flags: <defaults>
</compile_context>

<pallas_src>
import jax
import jax.numpy as jnp
from jax.experimental import pallas as pl
from jax.experimental.pallas import tpu as pltpu


TILE_R = 1024   # rows of 128 lanes per grid step (multiple of 8)
LANES = 128


def _sigmoid(z):
    # logistic(z) == 0.5 * tanh(0.5 * z) + 0.5  -> a single native EUP tanh.
    return 0.5 * jnp.tanh(0.5 * z) + 0.5


def mlp_kernel(p_ref, perm_ref, x_ref, o_ref):
    """p_ref:    (23,)        f32 SMEM -- packed weights/biases (see pack_params).
    perm_ref: (128, 128)   f32 VMEM -- lane-swap permutation (P[r, r^1] = 1).
    x_ref:    (tile_r, 128) f32 VMEM -- interleaved samples:
              even lane = feature 0, odd lane = feature 1 of one sample.
    o_ref:    (tile_r, 128) f32 VMEM -- outputs, same interleaving.
    """
    # Scalar accessors into the packed parameter vector (weights stored (in, out)).
    def w1(i, j): return p_ref[0 + i * 2 + j]     # (2, 2)
    def b1(j):    return p_ref[4 + j]             # (2,)
    def w2(i, j): return p_ref[6 + i * 3 + j]     # (2, 3)
    def b2(j):    return p_ref[12 + j]            # (3,)
    def w3(i, j): return p_ref[15 + i * 2 + j]    # (3, 2)
    def b3(j):    return p_ref[21 + j]            # (2,)

    v = x_ref[...]                                              # (tile_r, 128)
    # partner[r, l] = v[r, l ^ 1]  (swap adjacent lanes) -- one MXU matmul;
    # direction-safe, keeps all deinterleave work off the VPU.
    partner = jnp.dot(v, perm_ref[...], preferred_element_type=jnp.float32)

    lane = jax.lax.broadcasted_iota(jnp.int32, v.shape, 1)
    even = (lane & 1) == 0
    x0 = jnp.where(even, v, partner)                            # feature 0 in every lane
    x1 = jnp.where(even, partner, v)                            # feature 1 in every lane

    # Layer 1: Linear(2 -> 2) + sigmoid  (VPU broadcast-MACs on dense vregs)
    h1 = [_sigmoid(x0 * w1(0, j) + x1 * w1(1, j) + b1(j)) for j in range(2)]
    # Layer 2: Linear(2 -> 3) + sigmoid
    h2 = [_sigmoid(h1[0] * w2(0, j) + h1[1] * w2(1, j) + b2(j)) for j in range(3)]
    # Layer 3: Linear(3 -> 2) + sigmoid; even lanes hold output column 0, odd column 1.
    z0 = h2[0] * w3(0, 0) + h2[1] * w3(1, 0) + h2[2] * w3(2, 0) + b3(0)
    z1 = h2[0] * w3(0, 1) + h2[1] * w3(1, 1) + h2[2] * w3(2, 1) + b3(1)
    o_ref[...] = _sigmoid(jnp.where(even, z0, z1))              # unmasked lane-dense store


def pack_params(p):
    """Flatten all weights/biases (weights stored as (in, out)) into one f32 vector."""
    return jnp.concatenate([
        p["w1"].reshape(-1), p["b1"].reshape(-1),
        p["w2"].reshape(-1), p["b2"].reshape(-1),
        p["w3"].reshape(-1), p["b3"].reshape(-1),
    ]).astype(jnp.float32)


def _lane_swap_matrix():
    """(128, 128) f32 permutation: out[:, l] picks in[:, l ^ 1]."""
    idx = jnp.arange(LANES, dtype=jnp.int32)
    return (jnp.bitwise_xor(idx[:, None], 1) == idx[None, :]).astype(jnp.float32)


def net_forward(x, params, *, tile_r=TILE_R):
    """x: (B, 2) float32 (PyTorch layout). Returns (B, 2) float32."""
    B = x.shape[0]
    assert x.shape[1] == 2
    p_flat = pack_params(params)
    perm = _lane_swap_matrix()

    # Row-major flatten keeps the PyTorch layout with no transpose pass:
    # flat[2b] = feature 0 of sample b (even lane), flat[2b+1] = feature 1 (odd lane).
    flat = x.astype(jnp.float32).reshape(-1)                    # (2B,)
    n = 2 * B
    rows = pl.cdiv(n, LANES)
    rows8 = ((rows + 7) // 8) * 8                               # sublane multiple
    tile_r = max(8, min(((int(tile_r) + 7) // 8) * 8, rows8))   # cap tile for tiny batches
    n_blocks = pl.cdiv(rows, tile_r)
    rows_p = n_blocks * tile_r
    pad = rows_p * LANES - n
    if pad:
        flat = jnp.pad(flat, (0, pad))                          # tail lanes are garbage, sliced off below
    xr = flat.reshape(rows_p, LANES)

    out = pl.pallas_call(
        mlp_kernel,
        out_shape=jax.ShapeDtypeStruct((rows_p, LANES), jnp.float32),
        grid=(n_blocks,),
        in_specs=[
            pl.BlockSpec(memory_space=pltpu.MemorySpace.SMEM),      # packed params (23,)
            pl.BlockSpec((LANES, LANES), lambda i: (0, 0)),         # lane-swap perm (constant block)
            pl.BlockSpec((tile_r, LANES), lambda i: (i, 0)),        # input tile
        ],
        out_specs=pl.BlockSpec((tile_r, LANES), lambda i: (i, 0)),
        compiler_params=pltpu.CompilerParams(
            dimension_semantics=("parallel",),                      # megacore sharding on v7x
            vmem_limit_bytes=32 * 1024 * 1024,                      # headroom; <= v7x 64 MiB physical
        ),
    )(p_flat, perm, xr)

    return out.reshape(-1)[:n].reshape(B, 2)


def init_params(key):
    """Deterministic init mimicking torch.nn.Linear default U(-1/sqrt(in), 1/sqrt(in)).
    Weights stored as (in_features, out_features); biases as (out_features,)."""
    def linear_init(k, fan_in, fan_out):
        kw, kb = jax.random.split(k)
        bound = 1.0 / jnp.sqrt(float(fan_in))
        w = jax.random.uniform(kw, (fan_in, fan_out), jnp.float32, -bound, bound)
        b = jax.random.uniform(kb, (fan_out,), jnp.float32, -bound, bound)
        return w, b

    k1, k2, k3 = jax.random.split(key, 3)
    w1, b1 = linear_init(k1, 2, 2)
    w2, b2 = linear_init(k2, 2, 3)
    w3, b3 = linear_init(k3, 3, 2)
    return {"w1": w1, "b1": b1, "w2": w2, "b2": b2, "w3": w3, "b3": b3}


def net_forward_ref(x, p):
    """Pure-JAX reference matching the PyTorch forward."""
    h = jax.nn.sigmoid(x @ p["w1"] + p["b1"])
    h = jax.nn.sigmoid(h @ p["w2"] + p["b2"])
    return jax.nn.sigmoid(h @ p["w3"] + p["b3"])


if __name__ == "__main__":
    key = jax.random.PRNGKey(0)
    kx, kp = jax.random.split(key)
    params = init_params(kp)

    # Multi-block grid case: B=1536 -> 24 rows, tile_r=8 -> 3 grid steps.
    B = 1536
    x = jax.random.normal(kx, (B, 2), jnp.float32)
    out = jax.block_until_ready(net_forward(x, params, tile_r=8))
    ref = net_forward_ref(x, params)
    assert out.shape == (B, 2)
    assert jnp.allclose(out, ref, atol=1e-4, rtol=1e-4), float(jnp.max(jnp.abs(out - ref)))

    # Default (large-tile) path + ragged batch (exercises pad-and-slice).
    B2 = 37
    x2 = jax.random.normal(kx, (B2, 2), jnp.float32)
    out2 = jax.block_until_ready(net_forward(x2, params))
    ref2 = net_forward_ref(x2, params)
    assert out2.shape == (B2, 2)
    assert jnp.allclose(out2, ref2, atol=1e-4, rtol=1e-4), float(jnp.max(jnp.abs(out2 - ref2)))

    print("KERNEL_OK")
</pallas_src>

<mosaic_0001>
module attributes {stable_mosaic.version = 11 : i64} {
  func.func @mlp_kernel(%arg0: i32, %arg1: memref<23xf32, #tpu.memory_space<smem>>, %arg2: memref<128x128xf32, #tpu.memory_space<vmem>>, %arg3: memref<8x128xf32, #tpu.memory_space<vmem>>, %arg4: memref<8x128xf32, #tpu.memory_space<vmem>>) attributes {dimension_semantics = [#tpu.dimension_semantics<parallel>], iteration_bounds = array<i64: 3>, scalar_prefetch = 0 : i64, scratch_operands = 0 : i64, tpu.core_type = #tpu.core_type<tc>, window_params = [{transform_indices = @transform_0, window_bounds = array<i64: 23>}, {pipeline_mode = #tpu.pipeline_mode<synchronous>, transform_indices = @transform_1, window_bounds = array<i64: 128, 128>}, {transform_indices = @transform_2, window_bounds = array<i64: 8, 128>}, {transform_indices = @transform_3, window_bounds = array<i64: 8, 128>}]} {
    %c0 = arith.constant 0 : index
    %c0_0 = arith.constant 0 : index
    %0 = vector.load %arg3[%c0, %c0_0] : memref<8x128xf32, #tpu.memory_space<vmem>>, vector<8x128xf32>
    %c0_1 = arith.constant 0 : index
    %c0_2 = arith.constant 0 : index
    %1 = vector.load %arg2[%c0_1, %c0_2] : memref<128x128xf32, #tpu.memory_space<vmem>>, vector<128x128xf32>
    %cst = arith.constant dense<0.000000e+00> : vector<8x128xf32>
    %2 = tpu.matmul %0, %1, %cst {dimension_numbers = #tpu.dot_dimension_numbers<[1], [0], [0], [1], [0, 0, 1, 1], [], []>} : vector<8x128xf32>, vector<128x128xf32>, vector<8x128xf32> -> vector<8x128xf32>
    %3 = tpu.iota {dimensions = array<i32: 1>} : vector<8x128xi32>
    %c1_i32 = arith.constant 1 : i32
    %4 = vector.broadcast %c1_i32 : i32 to vector<8x128xi32>
    %5 = arith.andi %3, %4 : vector<8x128xi32>
    %c0_i32 = arith.constant 0 : i32
    %6 = vector.broadcast %c0_i32 : i32 to vector<8x128xi32>
    %7 = arith.cmpi eq, %5, %6 : vector<8x128xi32>
    %8 = arith.select %7, %0, %2 : vector<8x128xi1>, vector<8x128xf32>
    %9 = arith.select %7, %2, %0 : vector<8x128xi1>, vector<8x128xf32>
    %c0_3 = arith.constant 0 : index
    %10 = memref.load %arg1[%c0_3] : memref<23xf32, #tpu.memory_space<smem>>
    %11 = vector.broadcast %10 : f32 to vector<8x128xf32>
    %12 = arith.mulf %8, %11 : vector<8x128xf32>
    %c2 = arith.constant 2 : index
    %13 = memref.load %arg1[%c2] : memref<23xf32, #tpu.memory_space<smem>>
    %14 = vector.broadcast %13 : f32 to vector<8x128xf32>
    %15 = arith.mulf %9, %14 : vector<8x128xf32>
    %16 = arith.addf %12, %15 : vector<8x128xf32>
    %c4 = arith.constant 4 : index
    %17 = memref.load %arg1[%c4] : memref<23xf32, #tpu.memory_space<smem>>
    %18 = vector.broadcast %17 : f32 to vector<8x128xf32>
    %19 = arith.addf %16, %18 : vector<8x128xf32>
    %cst_4 = arith.constant 5.000000e-01 : f32
    %20 = vector.broadcast %cst_4 : f32 to vector<8x128xf32>
    %21 = arith.mulf %20, %19 : vector<8x128xf32>
    %22 = math.tanh %21 : vector<8x128xf32>
    %cst_5 = arith.constant 5.000000e-01 : f32
    %23 = vector.broadcast %cst_5 : f32 to vector<8x128xf32>
    %24 = arith.mulf %23, %22 : vector<8x128xf32>
    %cst_6 = arith.constant 5.000000e-01 : f32
    %25 = vector.broadcast %cst_6 : f32 to vector<8x128xf32>
    %26 = arith.addf %24, %25 : vector<8x128xf32>
    %c1 = arith.constant 1 : index
    %27 = memref.load %arg1[%c1] : memref<23xf32, #tpu.memory_space<smem>>
    %28 = vector.broadcast %27 : f32 to vector<8x128xf32>
    %29 = arith.mulf %8, %28 : vector<8x128xf32>
    %c3 = arith.constant 3 : index
    %30 = memref.load %arg1[%c3] : memref<23xf32, #tpu.memory_space<smem>>
    %31 = vector.broadcast %30 : f32 to vector<8x128xf32>
    %32 = arith.mulf %9, %31 : vector<8x128xf32>
    %33 = arith.addf %29, %32 : vector<8x128xf32>
    %c5 = arith.constant 5 : index
    %34 = memref.load %arg1[%c5] : memref<23xf32, #tpu.memory_space<smem>>
    %35 = vector.broadcast %34 : f32 to vector<8x128xf32>
    %36 = arith.addf %33, %35 : vector<8x128xf32>
    %cst_7 = arith.constant 5.000000e-01 : f32
    %37 = vector.broadcast %cst_7 : f32 to vector<8x128xf32>
    %38 = arith.mulf %37, %36 : vector<8x128xf32>
    %39 = math.tanh %38 : vector<8x128xf32>
    %cst_8 = arith.constant 5.000000e-01 : f32
    %40 = vector.broadcast %cst_8 : f32 to vector<8x128xf32>
    %41 = arith.mulf %40, %39 : vector<8x128xf32>
    %cst_9 = arith.constant 5.000000e-01 : f32
    %42 = vector.broadcast %cst_9 : f32 to vector<8x128xf32>
    %43 = arith.addf %41, %42 : vector<8x128xf32>
    %c6 = arith.constant 6 : index
    %44 = memref.load %arg1[%c6] : memref<23xf32, #tpu.memory_space<smem>>
    %45 = vector.broadcast %44 : f32 to vector<8x128xf32>
    %46 = arith.mulf %26, %45 : vector<8x128xf32>
    %c9 = arith.constant 9 : index
    %47 = memref.load %arg1[%c9] : memref<23xf32, #tpu.memory_space<smem>>
    %48 = vector.broadcast %47 : f32 to vector<8x128xf32>
    %49 = arith.mulf %43, %48 : vector<8x128xf32>
    %50 = arith.addf %46, %49 : vector<8x128xf32>
    %c12 = arith.constant 12 : index
    %51 = memref.load %arg1[%c12] : memref<23xf32, #tpu.memory_space<smem>>
    %52 = vector.broadcast %51 : f32 to vector<8x128xf32>
    %53 = arith.addf %50, %52 : vector<8x128xf32>
    %cst_10 = arith.constant 5.000000e-01 : f32
    %54 = vector.broadcast %cst_10 : f32 to vector<8x128xf32>
    %55 = arith.mulf %54, %53 : vector<8x128xf32>
    %56 = math.tanh %55 : vector<8x128xf32>
    %cst_11 = arith.constant 5.000000e-01 : f32
    %57 = vector.broadcast %cst_11 : f32 to vector<8x128xf32>
    %58 = arith.mulf %57, %56 : vector<8x128xf32>
    %cst_12 = arith.constant 5.000000e-01 : f32
    %59 = vector.broadcast %cst_12 : f32 to vector<8x128xf32>
    %60 = arith.addf %58, %59 : vector<8x128xf32>
    %c7 = arith.constant 7 : index
    %61 = memref.load %arg1[%c7] : memref<23xf32, #tpu.memory_space<smem>>
    %62 = vector.broadcast %61 : f32 to vector<8x128xf32>
    %63 = arith.mulf %26, %62 : vector<8x128xf32>
    %c10 = arith.constant 10 : index
    %64 = memref.load %arg1[%c10] : memref<23xf32, #tpu.memory_space<smem>>
    %65 = vector.broadcast %64 : f32 to vector<8x128xf32>
    %66 = arith.mulf %43, %65 : vector<8x128xf32>
    %67 = arith.addf %63, %66 : vector<8x128xf32>
    %c13 = arith.constant 13 : index
    %68 = memref.load %arg1[%c13] : memref<23xf32, #tpu.memory_space<smem>>
    %69 = vector.broadcast %68 : f32 to vector<8x128xf32>
    %70 = arith.addf %67, %69 : vector<8x128xf32>
    %cst_13 = arith.constant 5.000000e-01 : f32
    %71 = vector.broadcast %cst_13 : f32 to vector<8x128xf32>
    %72 = arith.mulf %71, %70 : vector<8x128xf32>
    %73 = math.tanh %72 : vector<8x128xf32>
    %cst_14 = arith.constant 5.000000e-01 : f32
    %74 = vector.broadcast %cst_14 : f32 to vector<8x128xf32>
    %75 = arith.mulf %74, %73 : vector<8x128xf32>
    %cst_15 = arith.constant 5.000000e-01 : f32
    %76 = vector.broadcast %cst_15 : f32 to vector<8x128xf32>
    %77 = arith.addf %75, %76 : vector<8x128xf32>
    %c8 = arith.constant 8 : index
    %78 = memref.load %arg1[%c8] : memref<23xf32, #tpu.memory_space<smem>>
    %79 = vector.broadcast %78 : f32 to vector<8x128xf32>
    %80 = arith.mulf %26, %79 : vector<8x128xf32>
    %c11 = arith.constant 11 : index
    %81 = memref.load %arg1[%c11] : memref<23xf32, #tpu.memory_space<smem>>
    %82 = vector.broadcast %81 : f32 to vector<8x128xf32>
    %83 = arith.mulf %43, %82 : vector<8x128xf32>
    %84 = arith.addf %80, %83 : vector<8x128xf32>
    %c14 = arith.constant 14 : index
    %85 = memref.load %arg1[%c14] : memref<23xf32, #tpu.memory_space<smem>>
    %86 = vector.broadcast %85 : f32 to vector<8x128xf32>
    %87 = arith.addf %84, %86 : vector<8x128xf32>
    %cst_16 = arith.constant 5.000000e-01 : f32
    %88 = vector.broadcast %cst_16 : f32 to vector<8x128xf32>
    %89 = arith.mulf %88, %87 : vector<8x128xf32>
    %90 = math.tanh %89 : vector<8x128xf32>
    %cst_17 = arith.constant 5.000000e-01 : f32
    %91 = vector.broadcast %cst_17 : f32 to vector<8x128xf32>
    %92 = arith.mulf %91, %90 : vector<8x128xf32>
    %cst_18 = arith.constant 5.000000e-01 : f32
    %93 = vector.broadcast %cst_18 : f32 to vector<8x128xf32>
    %94 = arith.addf %92, %93 : vector<8x128xf32>
    %c15 = arith.constant 15 : index
    %95 = memref.load %arg1[%c15] : memref<23xf32, #tpu.memory_space<smem>>
    %96 = vector.broadcast %95 : f32 to vector<8x128xf32>
    %97 = arith.mulf %60, %96 : vector<8x128xf32>
    %c17 = arith.constant 17 : index
    %98 = memref.load %arg1[%c17] : memref<23xf32, #tpu.memory_space<smem>>
    %99 = vector.broadcast %98 : f32 to vector<8x128xf32>
    %100 = arith.mulf %77, %99 : vector<8x128xf32>
    %101 = arith.addf %97, %100 : vector<8x128xf32>
    %c19 = arith.constant 19 : index
    %102 = memref.load %arg1[%c19] : memref<23xf32, #tpu.memory_space<smem>>
    %103 = vector.broadcast %102 : f32 to vector<8x128xf32>
    %104 = arith.mulf %94, %103 : vector<8x128xf32>
    %105 = arith.addf %101, %104 : vector<8x128xf32>
    %c21 = arith.constant 21 : index
    %106 = memref.load %arg1[%c21] : memref<23xf32, #tpu.memory_space<smem>>
    %107 = vector.broadcast %106 : f32 to vector<8x128xf32>
    %108 = arith.addf %105, %107 : vector<8x128xf32>
    %c16 = arith.constant 16 : index
    %109 = memref.load %arg1[%c16] : memref<23xf32, #tpu.memory_space<smem>>
    %110 = vector.broadcast %109 : f32 to vector<8x128xf32>
    %111 = arith.mulf %60, %110 : vector<8x128xf32>
    %c18 = arith.constant 18 : index
    %112 = memref.load %arg1[%c18] : memref<23xf32, #tpu.memory_space<smem>>
    %113 = vector.broadcast %112 : f32 to vector<8x128xf32>
    %114 = arith.mulf %77, %113 : vector<8x128xf32>
    %115 = arith.addf %111, %114 : vector<8x128xf32>
    %c20 = arith.constant 20 : index
    %116 = memref.load %arg1[%c20] : memref<23xf32, #tpu.memory_space<smem>>
    %117 = vector.broadcast %116 : f32 to vector<8x128xf32>
    %118 = arith.mulf %94, %117 : vector<8x128xf32>
    %119 = arith.addf %115, %118 : vector<8x128xf32>
    %c22 = arith.constant 22 : index
    %120 = memref.load %arg1[%c22] : memref<23xf32, #tpu.memory_space<smem>>
    %121 = vector.broadcast %120 : f32 to vector<8x128xf32>
    %122 = arith.addf %119, %121 : vector<8x128xf32>
    %123 = arith.select %7, %108, %122 : vector<8x128xi1>, vector<8x128xf32>
    %cst_19 = arith.constant 5.000000e-01 : f32
    %124 = vector.broadcast %cst_19 : f32 to vector<8x128xf32>
    %125 = arith.mulf %124, %123 : vector<8x128xf32>
    %126 = math.tanh %125 : vector<8x128xf32>
    %cst_20 = arith.constant 5.000000e-01 : f32
    %127 = vector.broadcast %cst_20 : f32 to vector<8x128xf32>
    %128 = arith.mulf %127, %126 : vector<8x128xf32>
    %cst_21 = arith.constant 5.000000e-01 : f32
    %129 = vector.broadcast %cst_21 : f32 to vector<8x128xf32>
    %130 = arith.addf %128, %129 : vector<8x128xf32>
    %c0_22 = arith.constant 0 : index
    %c0_23 = arith.constant 0 : index
    %131 = vector.load %arg4[%c0_22, %c0_23] : memref<8x128xf32, #tpu.memory_space<vmem>>, vector<8x128xf32>
    tpu.vector_store %arg4[%c0_22, %c0_23], %130 {strides = array<i32>} : memref<8x128xf32, #tpu.memory_space<vmem>>, vector<8x128xf32>,
    return
  }
  func.func @transform_0(%arg0: i32) -> i32 {
    %c0_i32 = arith.constant 0 : i32
    %c0_i32_0 = arith.constant 0 : i32
    return %c0_i32 : i32
  }
  func.func @transform_1(%arg0: i32) -> (i32, i32) {
    %c0_i32 = arith.constant 0 : i32
    %c0_i32_0 = arith.constant 0 : i32
    %c0_i32_1 = arith.constant 0 : i32
    return %c0_i32, %c0_i32_0 : i32, i32
  }
  func.func @transform_2(%arg0: i32) -> (i32, i32) {
    %c0_i32 = arith.constant 0 : i32
    %c0_i32_0 = arith.constant 0 : i32
    return %arg0, %c0_i32 : i32, i32
  }
  func.func @transform_3(%arg0: i32) -> (i32, i32) {
    %c0_i32 = arith.constant 0 : i32
    %c0_i32_0 = arith.constant 0 : i32
    return %arg0, %c0_i32 : i32, i32
  }
}

</mosaic_0001>

<llo_original>
// kernel: tpu_custom_call.1
$region0: #{tpu_custom_call.1}
  #allocation0 [shape = 'u32[]', space=smem, size = 0x4, offset = 0x4, fixed_abs, tag = 'smem constant byte address 0x4 - core index']
  #allocation1 [shape = 'u32[144,128]{1,0:T(1,128)}', space=vmem, size = 0x12000, scoped, tag = 'internal scratch']
  %s0 = inlined_call_operand.hbm [shape: f32[23], index: 0, kind: input, shape index: {}]
  %s1 = inlined_call_operand.hbm [shape: f32[128,128], index: 1, kind: input, shape index: {}]
  %s2 = inlined_call_operand.hbm [shape: f32[24,128], index: 2, kind: input, shape index: {}]
  %s3 = inlined_call_operand.hbm [shape: f32[24,128], index: 3, kind: output, shape index: {}]
  %s4 = sld [smem:[#allocation0]]
  $region57: #{tpu_custom_call.1} parent=0
    _
  %s6 = ssub.s32 1, %s4
  %s7 = scalar_select 0, %s6, %s4
  $region1: #{tpu_custom_call.1} parent=0
    #allocation2 [shape = 'u8[512]{0}', space=smem, size = 0x200, scoped, tag = 'input window, operand 0, single buffered']
    #allocation3 [shape = 's32[2]{0}', space=sflag, size = 0x8, scoped, tag = 'scoped memory for tpu_custom_call.1']
    #allocation4 [shape = 's32[2]{0}', space=sflag, size = 0x8, scoped, tag = 'scoped memory for tpu_custom_call.1']
    #allocation5 [shape = 's32[2]{0}', space=sflag, size = 0x8, scoped, tag = 'scoped memory for tpu_custom_call.1']
    #allocation6 [shape = 'u8[65536]{0}', space=vmem, size = 0x10000, scoped, tag = 'input window, operand 1, single buffered']
    #allocation7 [shape = 'u8[8192]{0}', space=vmem, size = 0x2000, scoped, tag = 'input window, operand 2']
    #allocation8 [shape = 's32[2]{0}', space=sflag, size = 0x8, scoped, tag = 'scoped memory for tpu_custom_call.1']
    #allocation9 [shape = 'u8[8192]{0}', space=vmem, size = 0x2000, scoped, tag = 'output window, operand 0']
    %8 = vsyncpa [#allocation5], 0
    %9 = vsyncpa [#allocation3], 0
    %10 = vsyncpa [#allocation8], 0
    %s11 = scalar_lea.sflag [#allocation8], 1
    %12 = vsyncpa %s11, 0
    %13 = vsyncpa [#allocation4], 0
    %s14 = scalar_lea.sflag [#allocation4], 1
    %15 = vsyncpa %s14, 0
    loop: start=0, step=1, limit=5
    $region2: #{tpu_custom_call.1} parent=1 // loop_pre_header
      _
    $region3: #{tpu_custom_call.1} parent=1 // loop_header
      %s17 = sphi 0, %s21
      %p18 = scmp.ge.s32.totalorder %s17, 5
      %s25 = sphi 0, %s25
      %s27 = sphi 0, %s25
      %s28 = sphi 0, %s27
      %s42 = sphi 0, %s28
      %s46 = sphi 0, %s46
      %s48 = sphi 0, %s46
      %s49 = sphi 0, %s48
      %s63 = sphi 0, %s49
      %s69 = sphi 0, %s71
      %s72 = sphi 0, %s69
      %s73 = sphi 0, %s72
      %s89 = sphi 0, %s73
      %s95 = sphi 0, %s97
      %s98 = sphi 0, %s95
      %s99 = sphi 0, %s98
      %s115 = sphi 0, %s99
    $region4: #{tpu_custom_call.1} parent=1 // loop_header_branch
      %20 = sbr.rel (%p18) target = $region8
    $region5: #{tpu_custom_call.1} parent=1 // loop_body
      %s22 = ssub.s32 %s17, 1
      %s23 = ssub.s32 %s17, 2
      %s24 = sadd.s32 %s17, 1
      %s26 = sadd.s32 %s25, 1
      %p29 = scmp.eq.s32.totalorder %s17, 2
      %p30 = scmp.ne.s32.totalorder %s25, %s27
      %p31 = scmp.eq.s32.totalorder %s17, 0
      %p32 = por %p30, %p31
      %p33 = scmp.ne.s32.totalorder %s25, %s27
      %p34 = scmp.eq.s32.totalorder %s22, 2
      %p35 = por %p33, %p34
      %p36 = scmp.ne.s32.totalorder %s27, %s28
      %p37 = scmp.eq.s32.totalorder %s22, 0
      %p38 = por %p36, %p37
      %p39 = scmp.ne.s32.totalorder %s27, %s28
      %p40 = scmp.eq.s32.totalorder %s23, 2
      %p41 = por %p39, %p40
      %p43 = scmp.ne.s32.totalorder %s28, %s42
      %p44 = scmp.eq.s32.totalorder %s23, 0
      %p45 = por %p43, %p44
      %s47 = sadd.s32 %s46, 1
      %p50 = scmp.eq.s32.totalorder %s17, 2
      %p51 = scmp.ne.s32.totalorder %s46, %s48
      %p52 = scmp.eq.s32.totalorder %s17, 0
      %p53 = por %p51, %p52
      %p54 = scmp.ne.s32.totalorder %s46, %s48
      %p55 = scmp.eq.s32.totalorder %s22, 2
      %p56 = por %p54, %p55
      %p57 = scmp.ne.s32.totalorder %s48, %s49
      %p58 = scmp.eq.s32.totalorder %s22, 0
      %p59 = por %p57, %p58
      %p60 = scmp.ne.s32.totalorder %s48, %s49
      %p61 = scmp.eq.s32.totalorder %s23, 2
      %p62 = por %p60, %p61
      %p64 = scmp.ne.s32.totalorder %s49, %s63
      %p65 = scmp.eq.s32.totalorder %s23, 0
      %p66 = por %p64, %p65
      %s67 = ssub.s32 %s17, %s24
      %p68 = scmp.eq.s32.totalorder %s67, 0
      %s70 = sadd.s32 %s69, 1
      %s71 = scalar_select %p68, %s69, %s70
      %p74 = pneg %p68
      %p75 = scmp.eq.s32.totalorder %s17, 2
      %p76 = por %p74, %p75
      %p77 = scmp.ne.s32.totalorder %s69, %s72
      %p78 = scmp.eq.s32.totalorder %s17, 0
      %p79 = por %p77, %p78
      %p80 = scmp.ne.s32.totalorder %s69, %s72
      %p81 = scmp.eq.s32.totalorder %s22, 2
      %p82 = por %p80, %p81
      %p83 = scmp.ne.s32.totalorder %s72, %s73
      %p84 = scmp.eq.s32.totalorder %s22, 0
      %p85 = por %p83, %p84
      %p86 = scmp.ne.s32.totalorder %s72, %s73
      %p87 = scmp.eq.s32.totalorder %s23, 2
      %p88 = por %p86, %p87
      %p90 = scmp.ne.s32.totalorder %s73, %s89
      %p91 = scmp.eq.s32.totalorder %s23, 0
      %p92 = por %p90, %p91
      %s93 = ssub.s32 %s17, %s24
      %p94 = scmp.eq.s32.totalorder %s93, 0
      %s96 = sadd.s32 %s95, 1
      %s97 = scalar_select %p94, %s95, %s96
      %p100 = pneg %p94
      %p101 = scmp.eq.s32.totalorder %s17, 2
      %p102 = por %p100, %p101
      %p103 = scmp.ne.s32.totalorder %s95, %s98
      %p104 = scmp.eq.s32.totalorder %s17, 0
      %p105 = por %p103, %p104
      %p106 = scmp.ne.s32.totalorder %s95, %s98
      %p107 = scmp.eq.s32.totalorder %s22, 2
      %p108 = por %p106, %p107
      %p109 = scmp.ne.s32.totalorder %s98, %s99
      %p110 = scmp.eq.s32.totalorder %s22, 0
      %p111 = por %p109, %p110
      %p112 = scmp.ne.s32.totalorder %s98, %s99
      %p113 = scmp.eq.s32.totalorder %s23, 2
      %p114 = por %p112, %p113
      %p116 = scmp.ne.s32.totalorder %s99, %s115
      %p117 = scmp.eq.s32.totalorder %s23, 0
      %p118 = por %p116, %p117
      %p119 = scmp.le.s32.totalorder 1, %s17
      %p120 = scmp.lt.s32.totalorder %s17, 4
      %p121 = pnand %p119, %p120
      %p122 = pneg %p121
      // Predicated region
      $region9: #{tpu_custom_call.1} parent=5 // pred_check
        _
      $region10: #{tpu_custom_call.1} parent=5 // pred_check_branch
        %124 = sbr.rel (%p121) target = $region12
      $region11: #{tpu_custom_call.1} parent=5 // pred_region
        %s125 = ssub.s32 %s17, 1
        // Predicated region
        $region13: #{tpu_custom_call.1} parent=11 // pred_check
          %p126 = pneg %p38
        $region14: #{tpu_custom_call.1} parent=11 // pred_check_branch
          %128 = sbr.rel (%p126) target = $region16
        $region15: #{tpu_custom_call.1} parent=11 // pred_region
          %s130 = ssub.s32 16, 16
          %131 = vsyncadd [#allocation5], %s130
          %134 = dma.hbm_to_smem %s0, 16, [#allocation2], [#allocation5]
        $region16: #{tpu_custom_call.1} parent=11 // pred_fallthru
          _
        // Predicated region
        $region17: #{tpu_custom_call.1} parent=11 // pred_check
          %p135 = pneg %p59
        $region18: #{tpu_custom_call.1} parent=11 // pred_check_branch
          %137 = sbr.rel (%p135) target = $region20
        $region19: #{tpu_custom_call.1} parent=11 // pred_region
          %s139 = ssub.s32 2048, 2048
          %140 = vsyncadd [#allocation3], %s139
          %s141 = sshll.u32 [#allocation6], 4
          %s142 = int_to_ptr.vmem [resolvable:$true] %s141
          %147 = dma.hbm_to_vmem [thread:$0]  %s1, 2048, %s142, [#allocation3], 128, 128, 8
        $region20: #{tpu_custom_call.1} parent=11 // pred_fallthru
          _
      $region12: #{tpu_custom_call.1} parent=5 // pred_fallthru
        _
      %p148 = scmp.lt.s32.totalorder %s17, 3
      // Predicated region
      $region21: #{tpu_custom_call.1} parent=5 // pred_check
        %p149 = pneg %p148
      $region22: #{tpu_custom_call.1} parent=5 // pred_check_branch
        %151 = sbr.rel (%p149) target = $region24
      $region23: #{tpu_custom_call.1} parent=5 // pred_region
        // Predicated region
        $region25: #{tpu_custom_call.1} parent=23 // pred_check
          %p152 = pneg %p79
        $region26: #{tpu_custom_call.1} parent=23 // pred_check_branch
          %154 = sbr.rel (%p152) target = $region28
        $region27: #{tpu_custom_call.1} parent=23 // pred_region
          %s155 = sand.u32 %s69, 1
          %s156 = scalar_lea.sflag [#allocation8], %s155
          %s157 = sand.u32 %s69, 1
          %s158 = smul.addr %s157, 8
          %s159 = scalar_lea.vmem [#allocation7], %s158
          %s161 = ssub.s32 128, 128
          %162 = vsyncadd %s156, %s161
          %s163 = smul.addr %s17, 128
          %s164 = scalar_lea.hbm %s2, %s163
          %s166 = sshll.u32 %s159, 4
          %s167 = int_to_ptr.vmem [resolvable:$true] %s166
          %169 = dma.hbm_to_vmem [thread:$0]  %s164, 128, %s167, %s156
        $region28: #{tpu_custom_call.1} parent=23 // pred_fallthru
          _
      $region24: #{tpu_custom_call.1} parent=5 // pred_fallthru
        _
      %p170 = scmp.le.s32.totalorder 1, %s17
      %p171 = scmp.lt.s32.totalorder %s17, 4
      %p172 = pnand %p170, %p171
      %p173 = pneg %p172
      // Predicated region
      $region29: #{tpu_custom_call.1} parent=5 // pred_check
        _
      $region30: #{tpu_custom_call.1} parent=5 // pred_check_branch
        %175 = sbr.rel (%p172) target = $region32
      $region31: #{tpu_custom_call.1} parent=5 // pred_region
        %s176 = ssub.s32 %s17, 1
        // Predicated region
        $region33: #{tpu_custom_call.1} parent=31 // pred_check
          %p177 = pneg %p38
        $region34: #{tpu_custom_call.1} parent=31 // pred_check_branch
          %179 = sbr.rel (%p177) target = $region36
        $region35: #{tpu_custom_call.1} parent=31 // pred_region
          %180 = dma.done [#allocation5], 16
        $region36: #{tpu_custom_call.1} parent=31 // pred_fallthru
          _
        // Predicated region
        $region37: #{tpu_custom_call.1} parent=31 // pred_check
          %p181 = pneg %p59
        $region38: #{tpu_custom_call.1} parent=31 // pred_check_branch
          %183 = sbr.rel (%p181) target = $region40
        $region39: #{tpu_custom_call.1} parent=31 // pred_region
          %184 = dma.done [#allocation3], 2048
        $region40: #{tpu_custom_call.1} parent=31 // pred_fallthru
          _
        %s185 = sand.u32 %s72, 1
        %s186 = scalar_lea.sflag [#allocation8], %s185
        %s187 = sand.u32 %s72, 1
        %s188 = smul.addr %s187, 8
        %s189 = scalar_lea.vmem [#allocation7], %s188
        // Predicated region
        $region41: #{tpu_custom_call.1} parent=31 // pred_check
          %p190 = pneg %p85
        $region42: #{tpu_custom_call.1} parent=31 // pred_check_branch
          %192 = sbr.rel (%p190) target = $region44
        $region43: #{tpu_custom_call.1} parent=31 // pred_region
          %193 = dma.done %s186, 128
        $region44: #{tpu_custom_call.1} parent=31 // pred_fallthru
          _
        %194 = sfence
        %p195 = pneg %p38
        %p196 = pneg %p35
        %p197 = pneg %p59
        %p198 = pneg %p56
        %s199 = sand.u32 %s72, 1
        %s200 = scalar_lea.sflag [#allocation8], %s199
        %s201 = sand.u32 %s72, 1
        %s202 = smul.addr %s201, 8
        %s203 = scalar_lea.vmem [#allocation7], %s202
        %p204 = pneg %p85
        %p205 = pneg %p82
        %p206 = pneg %p111
        %p207 = pneg %p108
        %s208 = sand.u32 %s98, 1
        %s209 = scalar_lea.sflag [#allocation4], %s208
        %s210 = sand.u32 %s98, 1
        %s211 = smul.addr %s210, 8
        %s212 = scalar_lea.vmem [#allocation9], %s211
        %v213 = vld [vmem:[%s189] sm:$0xff]
        %v214 = vld [vmem:[#allocation6] sm:$0xff]
        %v215 = vld [vmem:[#allocation6 + $0x8] sm:$0xff]
        %v216 = vld [vmem:[#allocation6 + $0x10] sm:$0xff]
        %v217 = vld [vmem:[#allocation6 + $0x18] sm:$0xff]
        %v218 = vld [vmem:[#allocation6 + $0x20] sm:$0xff]
        %v219 = vld [vmem:[#allocation6 + $0x28] sm:$0xff]
        %v220 = vld [vmem:[#allocation6 + $0x30] sm:$0xff]
        %v221 = vld [vmem:[#allocation6 + $0x38] sm:$0xff]
        %v222 = vld [vmem:[#allocation6 + $0x40] sm:$0xff]
        %v223 = vld [vmem:[#allocation6 + $0x48] sm:$0xff]
        %v224 = vld [vmem:[#allocation6 + $0x50] sm:$0xff]
        %v225 = vld [vmem:[#allocation6 + $0x58] sm:$0xff]
        %v226 = vld [vmem:[#allocation6 + $0x60] sm:$0xff]
        %v227 = vld [vmem:[#allocation6 + $0x68] sm:$0xff]
        %v228 = vld [vmem:[#allocation6 + $0x70] sm:$0xff]
        %v229 = vld [vmem:[#allocation6 + $0x78] sm:$0xff]
        %230 = vmatprep.subr.mxu0 0.0
        %231 = vmatpush1.msra.mxu0 %v229
        %232 = vmatprep.subr.mxu0 0.0
        %233 = vmatpush1.msra.mxu0 %v228
        %234 = vmatprep.subr.mxu0 0.0
        %235 = vmatpush1.msra.mxu0 %v227
        %236 = vmatprep.subr.mxu0 0.0
        %237 = vmatpush1.msra.mxu0 %v226
        %238 = vmatprep.subr.mxu0 0.0
        %239 = vmatpush1.msra.mxu0 %v225
        %240 = vmatprep.subr.mxu0 0.0
        %241 = vmatpush1.msra.mxu0 %v224
        %242 = vmatprep.subr.mxu0 0.0
        %243 = vmatpush1.msra.mxu0 %v223
        %244 = vmatprep.subr.mxu0 0.0
        %245 = vmatpush1.msra.mxu0 %v222
        %246 = vmatprep.subr.mxu0 0.0
        %247 = vmatpush1.msra.mxu0 %v221
        %248 = vmatprep.subr.mxu0 0.0
        %249 = vmatpush1.msra.mxu0 %v220
        %250 = vmatprep.subr.mxu0 0.0
        %251 = vmatpush1.msra.mxu0 %v219
        %252 = vmatprep.subr.mxu0 0.0
        %253 = vmatpush1.msra.mxu0 %v218
        %254 = vmatprep.subr.mxu0 0.0
        %255 = vmatpush1.msra.mxu0 %v217
        %256 = vmatprep.subr.mxu0 0.0
        %257 = vmatpush1.msra.mxu0 %v216
        %258 = vmatprep.subr.mxu0 0.0
        %259 = vmatpush1.msra.mxu0 %v215
        %260 = vmatprep.subr.mxu0 0.0
        %261 = vmatpush1.msra.mxu0 %v214
        %262 = vmatprep.subr.mxu0 0.0
        %263 = vmatpush2.msra.mxu0 0.0
        %264 = vmatprep.subr.mxu0 0.0
        %265 = vmatpush2.msra.mxu0 0.0
        %266 = vmatprep.subr.mxu0 0.0
        %267 = vmatpush2.msra.mxu0 0.0
        %268 = vmatprep.subr.mxu0 0.0
        %269 = vmatpush2.msra.mxu0 0.0
        %270 = vmatprep.subr.mxu0 0.0
        %271 = vmatpush2.msra.mxu0 0.0
        %272 = vmatprep.subr.mxu0 0.0
        %273 = vmatpush2.msra.mxu0 0.0
        %274 = vmatprep.subr.mxu0 0.0
        %275 = vmatpush2.msra.mxu0 0.0
        %276 = vmatprep.subr.mxu0 0.0
        %277 = vmatpush2.msra.mxu0 0.0
        %278 = vmatprep.subr.mxu0 0.0
        %279 = vmatpush2.msra.mxu0 0.0
        %280 = vmatprep.subr.mxu0 0.0
        %281 = vmatpush2.msra.mxu0 0.0
        %282 = vmatprep.subr.mxu0 0.0
        %283 = vmatpush2.msra.mxu0 0.0
        %284 = vmatprep.subr.mxu0 0.0
        %285 = vmatpush2.msra.mxu0 0.0
        %286 = vmatprep.subr.mxu0 0.0
        %287 = vmatpush2.msra.mxu0 0.0
        %288 = vmatprep.subr.mxu0 0.0
        %289 = vmatpush2.msra.mxu0 0.0
        %290 = vmatprep.subr.mxu0 0.0
        %291 = vmatpush2.msra.mxu0 0.0
        %292 = vmatprep.subr.mxu0 0.0
        %293 = vmatpush2.msra.mxu0 0.0
        %294 = vmatprep.mubr.f32.mxu0 0.0
        %295 = vmatmul.mubr.f32.gmra.mxu0 %v213
        %v296 = vpop.f32.mrf.mxu0
        %v297 = vadd.f32 0.0, %v296
        %v298 = vpop.f32.mrf.mxu0
        %299 = vdwg.mxu0
        %v300 = vlaneseq
        %v301 = vand.u32 %v300, 127
        %v302 = vand.u32 %v301, 1
        %vm303 = vcmp.eq.s32.totalorder %v302, 0
        %v304 = vsel %vm303, %v213, %v297
        %v305 = vsel %vm303, %v297, %v213
        %s306 = sld [smem:[#allocation2]]
        %v307 = vstv %s306
        %v308 = vmul.f32 %v304, %v307
        %s309 = sld [smem:[#allocation2 + $0x2]]
        %v310 = vstv %s309
        %v311 = vmul.f32 %v305, %v310
        %v312 = vadd.f32 %v308, %v311
        %s313 = sld [smem:[#allocation2 + $0x4]]
        %v314 = vstv %s313
        %v315 = vadd.f32 %v312, %v314
        %v316 = vmul.f32 %v315, 0.5
        %v317 = vtanh.pop %v316
        %v318 = vmul.f32 %v317, 0.5
        %v319 = vadd.f32 %v318, 0.5
        %s320 = sld [smem:[#allocation2 + $0x1]]
        %v321 = vstv %s320
        %v322 = vmul.f32 %v304, %v321
        %s323 = sld [smem:[#allocation2 + $0x3]]
        %v324 = vstv %s323
        %v325 = vmul.f32 %v305, %v324
        %v326 = vadd.f32 %v322, %v325
        %s327 = sld [smem:[#allocation2 + $0x5]]
        %v328 = vstv %s327
        %v329 = vadd.f32 %v326, %v328
        %v330 = vmul.f32 %v329, 0.5
        %v331 = vtanh.pop %v330
        %v332 = vmul.f32 %v331, 0.5
        %v333 = vadd.f32 %v332, 0.5
        %s334 = sld [smem:[#allocation2 + $0x6]]
        %v335 = vstv %s334
        %v336 = vmul.f32 %v319, %v335
        %s337 = sld [smem:[#allocation2 + $0x9]]
        %v338 = vstv %s337
        %v339 = vmul.f32 %v333, %v338
        %v340 = vadd.f32 %v336, %v339
        %s341 = sld [smem:[#allocation2 + $0xc]]
        %v342 = vstv %s341
        %v343 = vadd.f32 %v340, %v342
        %v344 = vmul.f32 %v343, 0.5
        %v345 = vtanh.pop %v344
        %v346 = vmul.f32 %v345, 0.5
        %v347 = vadd.f32 %v346, 0.5
        %s348 = sld [smem:[#allocation2 + $0x7]]
        %v349 = vstv %s348
        %v350 = vmul.f32 %v319, %v349
        %s351 = sld [smem:[#allocation2 + $0xa]]
        %v352 = vstv %s351
        %v353 = vmul.f32 %v333, %v352
        %v354 = vadd.f32 %v350, %v353
        %s355 = sld [smem:[#allocation2 + $0xd]]
        %v356 = vstv %s355
        %v357 = vadd.f32 %v354, %v356
        %v358 = vmul.f32 %v357, 0.5
        %v359 = vtanh.pop %v358
        %v360 = vmul.f32 %v359, 0.5
        %v361 = vadd.f32 %v360, 0.5
        %s362 = sld [smem:[#allocation2 + $0x8]]
        %v363 = vstv %s362
        %v364 = vmul.f32 %v319, %v363
        %s365 = sld [smem:[#allocation2 + $0xb]]
        %v366 = vstv %s365
        %v367 = vmul.f32 %v333, %v366
        %v368 = vadd.f32 %v364, %v367
        %s369 = sld [smem:[#allocation2 + $0xe]]
        %v370 = vstv %s369
        %v371 = vadd.f32 %v368, %v370
        %v372 = vmul.f32 %v371, 0.5
        %v373 = vtanh.pop %v372
        %v374 = vmul.f32 %v373, 0.5
        %v375 = vadd.f32 %v374, 0.5
        %s376 = sld [smem:[#allocation2 + $0xf]]
        %v377 = vstv %s376
        %v378 = vmul.f32 %v347, %v377
        %s379 = sld [smem:[#allocation2 + $0x11]]
        %v380 = vstv %s379
        %v381 = vmul.f32 %v361, %v380
        %v382 = vadd.f32 %v378, %v381
        %s383 = sld [smem:[#allocation2 + $0x13]]
        %v384 = vstv %s383
        %v385 = vmul.f32 %v375, %v384
        %v386 = vadd.f32 %v382, %v385
        %s387 = sld [smem:[#allocation2 + $0x15]]
        %v388 = vstv %s387
        %v389 = vadd.f32 %v386, %v388
        %s390 = sld [smem:[#allocation2 + $0x10]]
        %v391 = vstv %s390
        %v392 = vmul.f32 %v347, %v391
        %s393 = sld [smem:[#allocation2 + $0x12]]
        %v394 = vstv %s393
        %v395 = vmul.f32 %v361, %v394
        %v396 = vadd.f32 %v392, %v395
        %s397 = sld [smem:[#allocation2 + $0x14]]
        %v398 = vstv %s397
        %v399 = vmul.f32 %v375, %v398
        %v400 = vadd.f32 %v396, %v399
        %s401 = sld [smem:[#allocation2 + $0x16]]
        %v402 = vstv %s401
        %v403 = vadd.f32 %v400, %v402
        %v404 = vsel %vm303, %v389, %v403
        %v405 = vmul.f32 %v404, 0.5
        %v406 = vtanh.pop %v405
        %v407 = vmul.f32 %v406, 0.5
        %v408 = vadd.f32 %v407, 0.5
        %409 = vst [vmem:[%s212] sm:$0xff] %v408
        %s410 = sand.u32 %s98, 1
        %s411 = scalar_lea.sflag [#allocation4], %s410
        %s412 = sand.u32 %s98, 1
        %s413 = smul.addr %s412, 8
        %s414 = scalar_lea.vmem [#allocation9], %s413
        // Predicated region
        $region45: #{tpu_custom_call.1} parent=31 // pred_check
          %p415 = pneg %p108
        $region46: #{tpu_custom_call.1} parent=31 // pred_check_branch
          %417 = sbr.rel (%p415) target = $region48
        $region47: #{tpu_custom_call.1} parent=31 // pred_region
          %s419 = ssub.s32 128, 128
          %420 = vsyncadd %s411, %s419
          %s421 = smul.addr %s22, 128
          %s422 = scalar_lea.hbm %s3, %s421
          %s424 = sshll.u32 %s414, 4
          %s425 = int_to_ptr.vmem [resolvable:$true] %s424
          %427 = dma.vmem_to_hbm [thread:$0]  %s425, 128, %s422, %s411
        $region48: #{tpu_custom_call.1} parent=31 // pred_fallthru
          _
      $region32: #{tpu_custom_call.1} parent=5 // pred_fallthru
        _
      %p428 = scmp.le.s32.totalorder 2, %s17
      // Predicated region
      $region49: #{tpu_custom_call.1} parent=5 // pred_check
        %p429 = pneg %p428
      $region50: #{tpu_custom_call.1} parent=5 // pred_check_branch
        %431 = sbr.rel (%p429) target = $region52
      $region51: #{tpu_custom_call.1} parent=5 // pred_region
        %s432 = ssub.s32 %s17, 2
        // Predicated region
        $region53: #{tpu_custom_call.1} parent=51 // pred_check
          %p433 = pneg %p114
        $region54: #{tpu_custom_call.1} parent=51 // pred_check_branch
          %435 = sbr.rel (%p433) target = $region56
        $region55: #{tpu_custom_call.1} parent=51 // pred_region
          %s436 = sand.u32 %s99, 1
          %s437 = scalar_lea.sflag [#allocation4], %s436
          %s438 = sand.u32 %s99, 1
          %s439 = smul.addr %s438, 8
          %s440 = scalar_lea.vmem [#allocation9], %s439
          %441 = dma.done %s437, 128
        $region56: #{tpu_custom_call.1} parent=51 // pred_fallthru
          _
      $region52: #{tpu_custom_call.1} parent=5 // pred_fallthru
        _
    $region6: #{tpu_custom_call.1} parent=1 // loop_footer
      %s21 = sadd.s32 1, %s17
    $region7: #{tpu_custom_call.1} parent=1 // loop_footer_branch
      %16 = sbr.rel target = $region3
    $region8: #{tpu_custom_call.1} parent=1 // loop_exit
      _
    %442 = vsyncpa [#allocation3], 1
    %s443 = scalar_lea.sflag [#allocation3], 1
    %444 = vsyncpa %s443, 1
    %445 = vsyncpa [#allocation8], 1
    %s446 = scalar_lea.sflag [#allocation8], 1
    %447 = vsyncpa %s446, 1
    %448 = vsyncpa [#allocation4], 1
    %s449 = scalar_lea.sflag [#allocation4], 1
    %450 = vsyncpa %s449, 1
    %451 = vsyncpa [#allocation5], 1
    %s452 = scalar_lea.sflag [#allocation5], 1
    %453 = vsyncpa %s452, 1

</llo_original>
